<compile_context>
chip_gen: v7x
topology: tpu7x:2x2x1
jax: 0.10.0
libtpu: 0.0.40
codegen_flags: <defaults>
</compile_context>

<pallas_src>
import jax
import jax.numpy as jnp
from jax.experimental import pallas as pl
from jax.experimental.pallas import tpu as pltpu

EPS = 1e-5


def _round_up(x, m):
    return (x + m - 1) // m * m


def _vmem_limit_bytes():
    """Scoped-VMEM budget derived from the actual chip, with 25% headroom."""
    try:
        cap = int(pltpu.get_tpu_info().vmem_capacity_bytes)
    except Exception:
        cap = 64 * 1024 * 1024
    return min(cap * 3 // 4, 96 * 1024 * 1024)


def _pick_batch_tile(n, per_img_bytes, fixed_bytes, budget_bytes, cap=8):
    """Largest divisor of n (<= cap) whose per-step VMEM footprint fits."""
    best = 1
    for d in range(1, min(n, cap) + 1):
        if n % d == 0 and fixed_bytes + d * per_img_bytes <= budget_bytes:
            best = d
    return best


def _make_conv_stats_kernel(b_tile, L, OW):
    """Pass 1: conv (3 accumulated MXU matmuls per image) + f32 y stash +
    per-block centered BN partial statistics."""
    inv_cnt = 1.0 / float(b_tile * L)

    def kernel(xe_ref, xo_ref, w_ref, y_ref, sum_ref, m2_ref):
        w0 = w_ref[0]                             # (OC, 3*IC) bf16, kh = 0
        w1 = w_ref[1]                             # kh = 1
        w2 = w_ref[2]                             # kh = 2

        ysum = None
        for b in range(b_tile):                   # static unroll over the batch block
            xe = xe_ref[b]                        # (3*IC, Le) bf16, even padded rows
            xo = xo_ref[b]                        # (3*IC, Le) bf16, odd padded rows
            v0 = xe[:, 0:L]                       # rows 2*oh
            v1 = xo[:, 0:L]                       # rows 2*oh + 1
            v2 = xe[:, OW:OW + L]                 # rows 2*oh + 2 (shifted view)
            y = jnp.dot(w0, v0, preferred_element_type=jnp.float32)
            y = y + jnp.dot(w1, v1, preferred_element_type=jnp.float32)
            y = y + jnp.dot(w2, v2, preferred_element_type=jnp.float32)
            y_ref[b] = y                          # stash conv output, f32 (OC, L)
            s = jnp.sum(y, axis=1, keepdims=True)
            ysum = s if ysum is None else ysum + s

        mean = ysum * inv_cnt                     # per-channel block mean (OC, 1)
        m2 = None
        for b in range(b_tile):                   # centered second moment of the block
            d = y_ref[b] - mean
            p = jnp.sum(d * d, axis=1, keepdims=True)
            m2 = p if m2 is None else m2 + p

        sum_ref[...] = ysum                       # (OC, 1) per-block partials
        m2_ref[...] = m2

    return kernel


def _make_apply_kernel(use_relu):
    """Pass 2: per-channel scale/shift (+ReLU) over the stashed conv output."""

    def kernel(y_ref, scale_ref, shift_ref, out_ref):
        y = y_ref[...]                            # (B, OC, L) f32
        out = y * scale_ref[...] + shift_ref[...]  # (OC, 1) broadcasts over (B, OC, L)
        if use_relu:
            out = jnp.maximum(out, 0.0)
        out_ref[...] = out

    return kernel


def conv_reg_forward(x_nchw, w_oihw, b, gamma, beta, *, use_relu=True):
    """ConvReg forward (s_H == 2*t_H branch). x: (N, s_C, H, W); w: (t_C, s_C, 3, 3)."""
    del b  # conv bias is cancelled exactly by the training-mode BN mean subtraction
    N, IC, H, W = x_nchw.shape
    OC, IC_w, KH, KW = w_oihw.shape
    assert IC == IC_w and KH == 3 and KW == 3
    assert H % 2 == 0 and W % 2 == 0
    OH, OW = H // 2, W // 2
    L = OH * OW                    # output pixels per image
    Le = (OH + 1) * OW             # pixels per parity-phase input slab (= L + OW)
    C3 = KW * IC                   # the 3 kw-taps folded into channels

    # ---- wrapper data prep (channels-major, bf16, no NCHW transpose) ----
    x_pad = jnp.pad(x_nchw.astype(jnp.bfloat16), ((0, 0), (0, 0), (1, 1), (1, 1)))
    # fold kw taps into channels: xcol[n, kw*IC+ic, hp, ow] = x_pad[n, ic, hp, 2*ow+kw]
    xcol = jnp.concatenate(
        [x_pad[:, :, :, kw:kw + 2 * OW:2] for kw in range(KW)], axis=1)   # (N, 3*IC, H+2, OW)
    # split padded rows by parity; flatten (row, ow) onto the lane axis
    xc_even = xcol[:, :, 0::2, :].reshape(N, C3, Le)   # padded rows 0, 2, ..., H
    xc_odd = xcol[:, :, 1::2, :].reshape(N, C3, Le)    # padded rows 1, 3, ..., H+1

    # weights: (OC, IC, KH, KW) -> per-kh (OC, kw*IC+ic), bf16
    w_k = jnp.transpose(w_oihw, (2, 0, 3, 1)).reshape(KH, OC, C3).astype(jnp.bfloat16)

    # ---- batch-block tile sizing against the real VMEM budget ----
    vmem_limit = _vmem_limit_bytes()
    slab_bytes = 2 * _round_up(C3, 16) * _round_up(Le, 128) * 2    # xe + xo, bf16
    ybuf_bytes = _round_up(OC, 8) * _round_up(L, 128) * 4          # f32 conv tile
    per_img = 2 * (slab_bytes + ybuf_bytes)                        # double-buffered
    w_bytes = 2 * KH * _round_up(OC, 16) * _round_up(C3, 128) * 2  # double-buffered W
    b_tile = _pick_batch_tile(N, per_img, w_bytes, vmem_limit // 2)
    G = N // b_tile

    cp = pltpu.CompilerParams(dimension_semantics=("parallel",),
                              vmem_limit_bytes=vmem_limit)

    xe_spec = pl.BlockSpec((b_tile, C3, Le), lambda n: (n, 0, 0))
    xo_spec = pl.BlockSpec((b_tile, C3, Le), lambda n: (n, 0, 0))
    w_spec = pl.BlockSpec((KH, OC, C3), lambda n: (0, 0, 0))
    y_spec = pl.BlockSpec((b_tile, OC, L), lambda n: (n, 0, 0))
    stat_spec = pl.BlockSpec((None, OC, 1), lambda n: (n, 0, 0))

    # ---- pass 1: conv + f32 stash + per-block centered partial stats ----
    y, bsum, bm2 = pl.pallas_call(
        _make_conv_stats_kernel(b_tile, L, OW),
        out_shape=(jax.ShapeDtypeStruct((N, OC, L), jnp.float32),
                   jax.ShapeDtypeStruct((G, OC, 1), jnp.float32),
                   jax.ShapeDtypeStruct((G, OC, 1), jnp.float32)),
        grid=(G,),
        in_specs=[xe_spec, xo_spec, w_spec],
        out_specs=(y_spec, stat_spec, stat_spec),
        compiler_params=cp,
    )(xc_even, xc_odd, w_k)

    # ---- combine per-block partials (Chan) + fold gamma/beta -> scale/shift ----
    cnt = float(b_tile * L)                         # elements per block per channel
    means_b = bsum[:, :, 0] / cnt                   # (G, OC)
    mean = jnp.mean(means_b, axis=0)                # (OC,)  equal-count combine
    m2 = (jnp.sum(bm2[:, :, 0], axis=0)
          + cnt * jnp.sum((means_b - mean[None, :]) ** 2, axis=0))
    var = jnp.maximum(m2 / float(N * L), 0.0)       # biased batch variance
    scale_v = gamma.astype(jnp.float32) * jax.lax.rsqrt(var + EPS)
    shift_v = beta.astype(jnp.float32) - mean * scale_v
    scale = scale_v.reshape(OC, 1)
    shift = shift_v.reshape(OC, 1)

    # ---- pass 2: scale/shift (+ReLU) over the stashed conv output ----
    out = pl.pallas_call(
        _make_apply_kernel(use_relu),
        out_shape=jax.ShapeDtypeStruct((N, OC, L), jnp.float32),
        grid=(G,),
        in_specs=[y_spec,
                  pl.BlockSpec((OC, 1), lambda n: (0, 0)),
                  pl.BlockSpec((OC, 1), lambda n: (0, 0))],
        out_specs=pl.BlockSpec((b_tile, OC, L), lambda n: (n, 0, 0)),
        compiler_params=cp,
    )(y, scale, shift)

    # (N, OC, OH*OW) is already NCHW with spatial flattened -> pure reshape, no transpose
    return out.reshape(N, OC, OH, OW)


def _reference(x_nchw, w_oihw, b, gamma, beta, *, use_relu=True):
    """Pure-JAX reference: Conv2d(k=3, s=2, p=1) + bias + BatchNorm2d(train) + ReLU.

    Inputs are rounded to bf16 (matching the kernel's MXU feed); everything else
    is f32, so kernel-vs-reference differences are summation-order noise.  The
    bias is kept here to demonstrate that dropping it in the kernel is exact
    (it cancels under the BN mean subtraction)."""
    xf = x_nchw.astype(jnp.bfloat16).astype(jnp.float32)
    wf = w_oihw.astype(jnp.bfloat16).astype(jnp.float32)
    y = jax.lax.conv_general_dilated(
        xf, wf, window_strides=(2, 2), padding=((1, 1), (1, 1)),
        dimension_numbers=("NCHW", "OIHW", "NCHW"),
        precision=jax.lax.Precision.HIGHEST)
    y = y + b.reshape(1, -1, 1, 1)
    mean = jnp.mean(y, axis=(0, 2, 3), keepdims=True)
    var = jnp.mean((y - mean) ** 2, axis=(0, 2, 3), keepdims=True)
    y = (y - mean) * jax.lax.rsqrt(var + EPS)
    y = y * gamma.reshape(1, -1, 1, 1) + beta.reshape(1, -1, 1, 1)
    return jnp.maximum(y, 0.0) if use_relu else y


if __name__ == "__main__":
    # s_shape = (2, 4, 16, 16), t_shape = (2, 8, 8, 8)  -> s_H == 2 * t_H branch
    N, s_C, s_H, s_W = 2, 4, 16, 16
    t_C = 8

    key = jax.random.PRNGKey(0)
    kx, kw_, kb = jax.random.split(key, 3)
    x = jax.random.normal(kx, (N, s_C, s_H, s_W), dtype=jnp.float32)

    # deterministic parameter init (Conv2d-style bounds; BN gamma=1, beta=0)
    fan_in = s_C * 3 * 3
    bound = 1.0 / (fan_in ** 0.5)
    w = jax.random.uniform(kw_, (t_C, s_C, 3, 3), minval=-bound, maxval=bound,
                           dtype=jnp.float32)
    b = jax.random.uniform(kb, (t_C,), minval=-bound, maxval=bound, dtype=jnp.float32)
    gamma = jnp.ones((t_C,), jnp.float32)
    beta = jnp.zeros((t_C,), jnp.float32)

    out = jax.block_until_ready(conv_reg_forward(x, w, b, gamma, beta, use_relu=True))
    ref = jax.block_until_ready(_reference(x, w, b, gamma, beta, use_relu=True))
    assert out.shape == (N, t_C, s_H // 2, s_W // 2)
    assert jnp.allclose(out, ref, atol=1e-3, rtol=1e-3), \
        float(jnp.max(jnp.abs(out - ref)))

    out2 = jax.block_until_ready(conv_reg_forward(x, w, b, gamma, beta, use_relu=False))
    ref2 = jax.block_until_ready(_reference(x, w, b, gamma, beta, use_relu=False))
    assert jnp.allclose(out2, ref2, atol=1e-3, rtol=1e-3), \
        float(jnp.max(jnp.abs(out2 - ref2)))

    print("KERNEL_OK")
</pallas_src>

<mosaic_0001>
module attributes {stable_mosaic.version = 11 : i64} {
  func.func @kernel(%arg0: i32, %arg1: memref<2x12x72xbf16, #tpu.memory_space<vmem>>, %arg2: memref<2x12x72xbf16, #tpu.memory_space<vmem>>, %arg3: memref<3x8x12xbf16, #tpu.memory_space<vmem>>, %arg4: memref<2x8x64xf32, #tpu.memory_space<vmem>>, %arg5: memref<1x8x1xf32, #tpu.memory_space<vmem>>, %arg6: memref<1x8x1xf32, #tpu.memory_space<vmem>>) attributes {dimension_semantics = [#tpu.dimension_semantics<parallel>], iteration_bounds = array<i64: 1>, scalar_prefetch = 0 : i64, scratch_operands = 0 : i64, tpu.core_type = #tpu.core_type<tc>, window_params = [{transform_indices = @transform_0, window_bounds = array<i64: 2, 12, 72>}, {transform_indices = @transform_1, window_bounds = array<i64: 2, 12, 72>}, {pipeline_mode = #tpu.pipeline_mode<synchronous>, transform_indices = @transform_2, window_bounds = array<i64: 3, 8, 12>}, {transform_indices = @transform_3, window_bounds = array<i64: 2, 8, 64>}, {transform_indices = @transform_4, window_bounds = array<i64: 1, 8, 1>}, {transform_indices = @transform_5, window_bounds = array<i64: 1, 8, 1>}]} {
    %c0 = arith.constant 0 : index
    %c0_0 = arith.constant 0 : index
    %c0_1 = arith.constant 0 : index
    %0 = vector.load %arg3[%c0, %c0_0, %c0_1] : memref<3x8x12xbf16, #tpu.memory_space<vmem>>, vector<1x8x12xbf16>
    %1 = vector.shape_cast %0 : vector<1x8x12xbf16> to vector<8x12xbf16>
    %c1 = arith.constant 1 : index
    %c0_2 = arith.constant 0 : index
    %c0_3 = arith.constant 0 : index
    %2 = vector.load %arg3[%c1, %c0_2, %c0_3] : memref<3x8x12xbf16, #tpu.memory_space<vmem>>, vector<1x8x12xbf16>
    %3 = vector.shape_cast %2 : vector<1x8x12xbf16> to vector<8x12xbf16>
    %c2 = arith.constant 2 : index
    %c0_4 = arith.constant 0 : index
    %c0_5 = arith.constant 0 : index
    %4 = vector.load %arg3[%c2, %c0_4, %c0_5] : memref<3x8x12xbf16, #tpu.memory_space<vmem>>, vector<1x8x12xbf16>
    %5 = vector.shape_cast %4 : vector<1x8x12xbf16> to vector<8x12xbf16>
    %c0_6 = arith.constant 0 : index
    %c0_7 = arith.constant 0 : index
    %c0_8 = arith.constant 0 : index
    %6 = vector.load %arg1[%c0_6, %c0_7, %c0_8] : memref<2x12x72xbf16, #tpu.memory_space<vmem>>, vector<1x12x72xbf16>
    %7 = vector.shape_cast %6 : vector<1x12x72xbf16> to vector<12x72xbf16>
    %c0_9 = arith.constant 0 : index
    %c0_10 = arith.constant 0 : index
    %c0_11 = arith.constant 0 : index
    %8 = vector.load %arg2[%c0_9, %c0_10, %c0_11] : memref<2x12x72xbf16, #tpu.memory_space<vmem>>, vector<1x12x72xbf16>
    %9 = vector.shape_cast %8 : vector<1x12x72xbf16> to vector<12x72xbf16>
    %10 = vector.extract_strided_slice %7 {offsets = [0, 0], sizes = [12, 64], strides = [1, 1]} : vector<12x72xbf16> to vector<12x64xbf16>
    %11 = vector.extract_strided_slice %9 {offsets = [0, 0], sizes = [12, 64], strides = [1, 1]} : vector<12x72xbf16> to vector<12x64xbf16>
    %12 = vector.extract_strided_slice %7 {offsets = [0, 8], sizes = [12, 64], strides = [1, 1]} : vector<12x72xbf16> to vector<12x64xbf16>
    %cst = arith.constant dense<0.000000e+00> : vector<8x64xf32>
    %13 = tpu.matmul %1, %10, %cst {dimension_numbers = #tpu.dot_dimension_numbers<[1], [0], [0], [1], [0, 0, 1, 1], [], []>} : vector<8x12xbf16>, vector<12x64xbf16>, vector<8x64xf32> -> vector<8x64xf32>
    %cst_12 = arith.constant dense<0.000000e+00> : vector<8x64xf32>
    %14 = tpu.matmul %3, %11, %cst_12 {dimension_numbers = #tpu.dot_dimension_numbers<[1], [0], [0], [1], [0, 0, 1, 1], [], []>} : vector<8x12xbf16>, vector<12x64xbf16>, vector<8x64xf32> -> vector<8x64xf32>
    %15 = arith.addf %13, %14 : vector<8x64xf32>
    %cst_13 = arith.constant dense<0.000000e+00> : vector<8x64xf32>
    %16 = tpu.matmul %5, %12, %cst_13 {dimension_numbers = #tpu.dot_dimension_numbers<[1], [0], [0], [1], [0, 0, 1, 1], [], []>} : vector<8x12xbf16>, vector<12x64xbf16>, vector<8x64xf32> -> vector<8x64xf32>
    %17 = arith.addf %15, %16 : vector<8x64xf32>
    %c0_14 = arith.constant 0 : index
    %c0_15 = arith.constant 0 : index
    %c0_16 = arith.constant 0 : index
    %18 = vector.load %arg4[%c0_14, %c0_15, %c0_16] : memref<2x8x64xf32, #tpu.memory_space<vmem>>, vector<1x8x64xf32>
    %19 = vector.shape_cast %18 : vector<1x8x64xf32> to vector<8x64xf32>
    %20 = vector.shape_cast %17 : vector<8x64xf32> to vector<1x8x64xf32>
    tpu.vector_store %arg4[%c0_14, %c0_15, %c0_16], %20 {strides = array<i32>} : memref<2x8x64xf32, #tpu.memory_space<vmem>>, vector<1x8x64xf32>,
    %cst_17 = arith.constant dense<0.000000e+00> : vector<8xf32>
    %21 = vector.multi_reduction <add>, %17, %cst_17 [1] : vector<8x64xf32> to vector<8xf32>
    %22 = vector.shape_cast %21 : vector<8xf32> to vector<8x1xf32>
    %c1_18 = arith.constant 1 : index
    %c0_19 = arith.constant 0 : index
    %c0_20 = arith.constant 0 : index
    %23 = vector.load %arg1[%c1_18, %c0_19, %c0_20] : memref<2x12x72xbf16, #tpu.memory_space<vmem>>, vector<1x12x72xbf16>
    %24 = vector.shape_cast %23 : vector<1x12x72xbf16> to vector<12x72xbf16>
    %c1_21 = arith.constant 1 : index
    %c0_22 = arith.constant 0 : index
    %c0_23 = arith.constant 0 : index
    %25 = vector.load %arg2[%c1_21, %c0_22, %c0_23] : memref<2x12x72xbf16, #tpu.memory_space<vmem>>, vector<1x12x72xbf16>
    %26 = vector.shape_cast %25 : vector<1x12x72xbf16> to vector<12x72xbf16>
    %27 = vector.extract_strided_slice %24 {offsets = [0, 0], sizes = [12, 64], strides = [1, 1]} : vector<12x72xbf16> to vector<12x64xbf16>
    %28 = vector.extract_strided_slice %26 {offsets = [0, 0], sizes = [12, 64], strides = [1, 1]} : vector<12x72xbf16> to vector<12x64xbf16>
    %29 = vector.extract_strided_slice %24 {offsets = [0, 8], sizes = [12, 64], strides = [1, 1]} : vector<12x72xbf16> to vector<12x64xbf16>
    %cst_24 = arith.constant dense<0.000000e+00> : vector<8x64xf32>
    %30 = tpu.matmul %1, %27, %cst_24 {dimension_numbers = #tpu.dot_dimension_numbers<[1], [0], [0], [1], [0, 0, 1, 1], [], []>} : vector<8x12xbf16>, vector<12x64xbf16>, vector<8x64xf32> -> vector<8x64xf32>
    %cst_25 = arith.constant dense<0.000000e+00> : vector<8x64xf32>
    %31 = tpu.matmul %3, %28, %cst_25 {dimension_numbers = #tpu.dot_dimension_numbers<[1], [0], [0], [1], [0, 0, 1, 1], [], []>} : vector<8x12xbf16>, vector<12x64xbf16>, vector<8x64xf32> -> vector<8x64xf32>
    %32 = arith.addf %30, %31 : vector<8x64xf32>
    %cst_26 = arith.constant dense<0.000000e+00> : vector<8x64xf32>
    %33 = tpu.matmul %5, %29, %cst_26 {dimension_numbers = #tpu.dot_dimension_numbers<[1], [0], [0], [1], [0, 0, 1, 1], [], []>} : vector<8x12xbf16>, vector<12x64xbf16>, vector<8x64xf32> -> vector<8x64xf32>
    %34 = arith.addf %32, %33 : vector<8x64xf32>
    %c1_27 = arith.constant 1 : index
    %c0_28 = arith.constant 0 : index
    %c0_29 = arith.constant 0 : index
    %35 = vector.load %arg4[%c1_27, %c0_28, %c0_29] : memref<2x8x64xf32, #tpu.memory_space<vmem>>, vector<1x8x64xf32>
    %36 = vector.shape_cast %35 : vector<1x8x64xf32> to vector<8x64xf32>
    %37 = vector.shape_cast %34 : vector<8x64xf32> to vector<1x8x64xf32>
    tpu.vector_store %arg4[%c1_27, %c0_28, %c0_29], %37 {strides = array<i32>} : memref<2x8x64xf32, #tpu.memory_space<vmem>>, vector<1x8x64xf32>,
    %cst_30 = arith.constant dense<0.000000e+00> : vector<8xf32>
    %38 = vector.multi_reduction <add>, %34, %cst_30 [1] : vector<8x64xf32> to vector<8xf32>
    %39 = vector.shape_cast %38 : vector<8xf32> to vector<8x1xf32>
    %40 = arith.addf %22, %39 : vector<8x1xf32>
    %cst_31 = arith.constant 7.812500e-03 : f32
    %41 = vector.broadcast %cst_31 : f32 to vector<8x1xf32>
    %42 = arith.mulf %40, %41 : vector<8x1xf32>
    %c0_32 = arith.constant 0 : index
    %c0_33 = arith.constant 0 : index
    %c0_34 = arith.constant 0 : index
    %43 = vector.load %arg4[%c0_32, %c0_33, %c0_34] : memref<2x8x64xf32, #tpu.memory_space<vmem>>, vector<1x8x64xf32>
    %44 = vector.shape_cast %43 : vector<1x8x64xf32> to vector<8x64xf32>
    %45 = vector.broadcast %42 : vector<8x1xf32> to vector<8x64xf32>
    %46 = arith.subf %44, %45 : vector<8x64xf32>
    %47 = arith.mulf %46, %46 : vector<8x64xf32>
    %cst_35 = arith.constant dense<0.000000e+00> : vector<8xf32>
    %48 = vector.multi_reduction <add>, %47, %cst_35 [1] : vector<8x64xf32> to vector<8xf32>
    %49 = vector.shape_cast %48 : vector<8xf32> to vector<8x1xf32>
    %c1_36 = arith.constant 1 : index
    %c0_37 = arith.constant 0 : index
    %c0_38 = arith.constant 0 : index
    %50 = vector.load %arg4[%c1_36, %c0_37, %c0_38] : memref<2x8x64xf32, #tpu.memory_space<vmem>>, vector<1x8x64xf32>
    %51 = vector.shape_cast %50 : vector<1x8x64xf32> to vector<8x64xf32>
    %52 = vector.broadcast %42 : vector<8x1xf32> to vector<8x64xf32>
    %53 = arith.subf %51, %52 : vector<8x64xf32>
    %54 = arith.mulf %53, %53 : vector<8x64xf32>
    %cst_39 = arith.constant dense<0.000000e+00> : vector<8xf32>
    %55 = vector.multi_reduction <add>, %54, %cst_39 [1] : vector<8x64xf32> to vector<8xf32>
    %56 = vector.shape_cast %55 : vector<8xf32> to vector<8x1xf32>
    %57 = arith.addf %49, %56 : vector<8x1xf32>
    %c0_40 = arith.constant 0 : index
    %c0_41 = arith.constant 0 : index
    %c0_42 = arith.constant 0 : index
    %58 = vector.load %arg5[%c0_40, %c0_41, %c0_42] : memref<1x8x1xf32, #tpu.memory_space<vmem>>, vector<1x8x1xf32>
    %59 = vector.shape_cast %58 : vector<1x8x1xf32> to vector<8x1xf32>
    %60 = vector.shape_cast %40 : vector<8x1xf32> to vector<1x8x1xf32>
    tpu.vector_store %arg5[%c0_40, %c0_41, %c0_42], %60 {strides = array<i32>} : memref<1x8x1xf32, #tpu.memory_space<vmem>>, vector<1x8x1xf32>,
    %c0_43 = arith.constant 0 : index
    %c0_44 = arith.constant 0 : index
    %c0_45 = arith.constant 0 : index
    %61 = vector.load %arg6[%c0_43, %c0_44, %c0_45] : memref<1x8x1xf32, #tpu.memory_space<vmem>>, vector<1x8x1xf32>
    %62 = vector.shape_cast %61 : vector<1x8x1xf32> to vector<8x1xf32>
    %63 = vector.shape_cast %57 : vector<8x1xf32> to vector<1x8x1xf32>
    tpu.vector_store %arg6[%c0_43, %c0_44, %c0_45], %63 {strides = array<i32>} : memref<1x8x1xf32, #tpu.memory_space<vmem>>, vector<1x8x1xf32>,
    return
  }
  func.func @transform_0(%arg0: i32) -> (i32, i32, i32) {
    %c0_i32 = arith.constant 0 : i32
    %c0_i32_0 = arith.constant 0 : i32
    %c0_i32_1 = arith.constant 0 : i32
    return %arg0, %c0_i32, %c0_i32_0 : i32, i32, i32
  }
  func.func @transform_1(%arg0: i32) -> (i32, i32, i32) {
    %c0_i32 = arith.constant 0 : i32
    %c0_i32_0 = arith.constant 0 : i32
    %c0_i32_1 = arith.constant 0 : i32
    return %arg0, %c0_i32, %c0_i32_0 : i32, i32, i32
  }
  func.func @transform_2(%arg0: i32) -> (i32, i32, i32) {
    %c0_i32 = arith.constant 0 : i32
    %c0_i32_0 = arith.constant 0 : i32
    %c0_i32_1 = arith.constant 0 : i32
    %c0_i32_2 = arith.constant 0 : i32
    return %c0_i32, %c0_i32_0, %c0_i32_1 : i32, i32, i32
  }
  func.func @transform_3(%arg0: i32) -> (i32, i32, i32) {
    %c0_i32 = arith.constant 0 : i32
    %c0_i32_0 = arith.constant 0 : i32
    %c0_i32_1 = arith.constant 0 : i32
    return %arg0, %c0_i32, %c0_i32_0 : i32, i32, i32
  }
  func.func @transform_4(%arg0: i32) -> (i32, i32, i32) {
    %c0_i32 = arith.constant 0 : i32
    %c0_i32_0 = arith.constant 0 : i32
    %c0_i32_1 = arith.constant 0 : i32
    return %arg0, %c0_i32, %c0_i32_0 : i32, i32, i32
  }
  func.func @transform_5(%arg0: i32) -> (i32, i32, i32) {
    %c0_i32 = arith.constant 0 : i32
    %c0_i32_0 = arith.constant 0 : i32
    %c0_i32_1 = arith.constant 0 : i32
    return %arg0, %c0_i32, %c0_i32_0 : i32, i32, i32
  }
}

</mosaic_0001>

<llo_original>
// kernel: tpu_custom_call.1
$region0: #{tpu_custom_call.1}
  #allocation0 [shape = 'u32[]', space=smem, size = 0x4, offset = 0x4, fixed_abs, tag = 'smem constant byte address 0x4 - core index']
  #allocation1 [shape = 'u32[144,128]{1,0:T(1,128)}', space=vmem, size = 0x12000, scoped, tag = 'internal scratch']
  %s0 = inlined_call_operand.vmem [shape: bf16[2,12,72], index: 0, kind: input, shape index: {}]
  %s1 = inlined_call_operand.vmem [shape: bf16[2,12,72], index: 1, kind: input, shape index: {}]
  %s2 = inlined_call_operand.vmem [shape: bf16[3,8,12], index: 2, kind: input, shape index: {}]
  %s3 = inlined_call_operand.hbm [shape: f32[2,8,64], index: 3, kind: output, shape index: {0}]
  %s4 = inlined_call_operand.vmem [shape: f32[1,8,1], index: 4, kind: output, shape index: {1}]
  %s5 = inlined_call_operand.vmem [shape: f32[1,8,1], index: 5, kind: output, shape index: {2}]
  %6 = xla_tuple %s3, %s4, %s5
  %s7 = sld [smem:[#allocation0]]
  $region38: #{tpu_custom_call.1} parent=0
    _
  %s9 = ssub.s32 1, %s7
  %s10 = scalar_select 0, %s9, %s7
  $region1: #{tpu_custom_call.1} parent=0
    #allocation2 [shape = 'u8[8192]{0}', space=vmem, size = 0x2000, scoped, tag = 'output window, operand 0, single buffered']
    #allocation3 [shape = 's32[1]{0}', space=sflag, size = 0x4, scoped, tag = 'scoped memory for tpu_custom_call.1']
    %11 = vsyncpa [#allocation3], 0
    // Predicated region
    $region2: #{tpu_custom_call.1} parent=1 // pred_check
      _
    $region3: #{tpu_custom_call.1} parent=1 // pred_check_branch
      %13 = sbr.rel (0) target = $region5
    $region4: #{tpu_custom_call.1} parent=1 // pred_region
      _
    $region5: #{tpu_custom_call.1} parent=1 // pred_fallthru
      _
    // Predicated region
    $region6: #{tpu_custom_call.1} parent=1 // pred_check
      _
    $region7: #{tpu_custom_call.1} parent=1 // pred_check_branch
      %15 = sbr.rel (0) target = $region9
    $region8: #{tpu_custom_call.1} parent=1 // pred_region
      _
    $region9: #{tpu_custom_call.1} parent=1 // pred_fallthru
      _
    // Predicated region
    $region10: #{tpu_custom_call.1} parent=1 // pred_check
      _
    $region11: #{tpu_custom_call.1} parent=1 // pred_check_branch
      %17 = sbr.rel (0) target = $region13
    $region12: #{tpu_custom_call.1} parent=1 // pred_region
      _
    $region13: #{tpu_custom_call.1} parent=1 // pred_fallthru
      _
    %v19 = vld [vmem:[%s2] sm:$0xf]
    %s20 = scalar_lea.vmem %s2, 4
    %v21 = vld [vmem:[%s20] sm:$0xf]
    %s22 = scalar_lea.vmem %s2, 8
    %v23 = vld [vmem:[%s22] sm:$0xf]
    %v24 = vld [vmem:[%s0] sm:$0xf]
    %v25 = vld [vmem:[%s0 + $0x4] sm:$0x3]
    %v26 = vld [vmem:[%s1] sm:$0xf]
    %v27 = vld [vmem:[%s1 + $0x4] sm:$0x3]
    %v30 = vunpack.c.l.b16 %v26
    %v31 = vunpack.c.l.b16 %v27
    %v32 = vpack.c.b16 %v31, %v30
    %vm33 = vcmask 97280
    %v35 = vsel %vm33, %v21, 0
    %vm37 = vcmask 1045504
    %v39 = vsel %vm37, %v32, 0
    %41 = vmatprep.subr.bf16.mxu0 0
    %42 = vmatpush1.bf16.msra.mxu0 %v39
    %43 = vmatprep.subr.bf16.mxu0 0
    %44 = vmatpush1.bf16.msra.mxu0 0
    %45 = vmatprep.subr.bf16.mxu0 0
    %46 = vmatpush1.bf16.msra.mxu0 0
    %47 = vmatprep.subr.bf16.mxu0 0
    %48 = vmatpush1.bf16.msra.mxu0 0
    %49 = vmatprep.subr.bf16.mxu0 0
    %50 = vmatpush1.bf16.msra.mxu0 0
    %51 = vmatprep.subr.bf16.mxu0 0
    %52 = vmatpush1.bf16.msra.mxu0 0
    %53 = vmatprep.subr.bf16.mxu0 0
    %54 = vmatpush1.bf16.msra.mxu0 0
    %55 = vmatprep.subr.bf16.mxu0 0
    %56 = vmatpush1.bf16.msra.mxu0 0
    %57 = vmatprep.subr.bf16.mxu0 0
    %58 = vmatpush1.bf16.msra.mxu0 0
    %59 = vmatprep.subr.bf16.mxu0 0
    %60 = vmatpush1.bf16.msra.mxu0 0
    %61 = vmatprep.subr.bf16.mxu0 0
    %62 = vmatpush1.bf16.msra.mxu0 0
    %63 = vmatprep.subr.bf16.mxu0 0
    %64 = vmatpush1.bf16.msra.mxu0 0
    %65 = vmatprep.subr.bf16.mxu0 0
    %66 = vmatpush1.bf16.msra.mxu0 0
    %67 = vmatprep.subr.bf16.mxu0 0
    %68 = vmatpush1.bf16.msra.mxu0 0
    %69 = vmatprep.subr.bf16.mxu0 0
    %70 = vmatpush1.bf16.msra.mxu0 0
    %71 = vmatprep.subr.bf16.mxu0 0
    %72 = vmatpush1.bf16.msra.mxu0 0
    %73 = vmatprep.mubr.bf16.mxu0 0
    %74 = vmatmul.mubr.bf16.gmra.mrb[0].mxu0 %v35
    %v75 = vpop.f32.mrb[0].mxu0
    %v76 = vadd.f32 0.0, %v75
    %v77 = vpop.f32.mrb[0].mxu0
    %v78 = vpop.f32.mrb[0].mxu0
    %v79 = vpop.f32.mrb[0].mxu0
    %80 = vdwg.mxu0
    %v83 = vunpack.c.l.b16 %v24
    %v84 = vunpack.c.l.b16 %v25
    %v85 = vpack.c.b16 %v84, %v83
    %v87 = vsel %vm33, %v19, 0
    %v90 = vsel %vm37, %v85, 0
    %92 = vmatprep.subr.bf16.mxu0 0
    %93 = vmatpush1.bf16.msra.mxu0 %v90
    %94 = vmatprep.subr.bf16.mxu0 0
    %95 = vmatpush1.bf16.msra.mxu0 0
    %96 = vmatprep.subr.bf16.mxu0 0
    %97 = vmatpush1.bf16.msra.mxu0 0
    %98 = vmatprep.subr.bf16.mxu0 0
    %99 = vmatpush1.bf16.msra.mxu0 0
    %100 = vmatprep.subr.bf16.mxu0 0
    %101 = vmatpush1.bf16.msra.mxu0 0
    %102 = vmatprep.subr.bf16.mxu0 0
    %103 = vmatpush1.bf16.msra.mxu0 0
    %104 = vmatprep.subr.bf16.mxu0 0
    %105 = vmatpush1.bf16.msra.mxu0 0
    %106 = vmatprep.subr.bf16.mxu0 0
    %107 = vmatpush1.bf16.msra.mxu0 0
    %108 = vmatprep.subr.bf16.mxu0 0
    %109 = vmatpush1.bf16.msra.mxu0 0
    %110 = vmatprep.subr.bf16.mxu0 0
    %111 = vmatpush1.bf16.msra.mxu0 0
    %112 = vmatprep.subr.bf16.mxu0 0
    %113 = vmatpush1.bf16.msra.mxu0 0
    %114 = vmatprep.subr.bf16.mxu0 0
    %115 = vmatpush1.bf16.msra.mxu0 0
    %116 = vmatprep.subr.bf16.mxu0 0
    %117 = vmatpush1.bf16.msra.mxu0 0
    %118 = vmatprep.subr.bf16.mxu0 0
    %119 = vmatpush1.bf16.msra.mxu0 0
    %120 = vmatprep.subr.bf16.mxu0 0
    %121 = vmatpush1.bf16.msra.mxu0 0
    %122 = vmatprep.subr.bf16.mxu0 0
    %123 = vmatpush1.bf16.msra.mxu0 0
    %124 = vmatprep.mubr.bf16.mxu0 0
    %125 = vmatmul.mubr.bf16.gmra.mrb[0].mxu0 %v87
    %v126 = vpop.f32.mrb[0].mxu0
    %v127 = vadd.f32 %v76, %v126
    %v128 = vpop.f32.mrb[0].mxu0
    %v129 = vpop.f32.mrb[0].mxu0
    %v130 = vpop.f32.mrb[0].mxu0
    %131 = vdwg.mxu0
    %132 = vrot.lane.b32.xlu0 %v85, 120
    %v133 = vpop.permute.xlu0 %132
    %v135 = vsel %vm33, %v23, 0
    %v138 = vsel %vm37, %v133, 0
    %140 = vmatprep.subr.bf16.mxu0 0
    %141 = vmatpush1.bf16.msra.mxu0 %v138
    %142 = vmatprep.subr.bf16.mxu0 0
    %143 = vmatpush1.bf16.msra.mxu0 0
    %144 = vmatprep.subr.bf16.mxu0 0
    %145 = vmatpush1.bf16.msra.mxu0 0
    %146 = vmatprep.subr.bf16.mxu0 0
    %147 = vmatpush1.bf16.msra.mxu0 0
    %148 = vmatprep.subr.bf16.mxu0 0
    %149 = vmatpush1.bf16.msra.mxu0 0
    %150 = vmatprep.subr.bf16.mxu0 0
    %151 = vmatpush1.bf16.msra.mxu0 0
    %152 = vmatprep.subr.bf16.mxu0 0
    %153 = vmatpush1.bf16.msra.mxu0 0
    %154 = vmatprep.subr.bf16.mxu0 0
    %155 = vmatpush1.bf16.msra.mxu0 0
    %156 = vmatprep.subr.bf16.mxu0 0
    %157 = vmatpush1.bf16.msra.mxu0 0
    %158 = vmatprep.subr.bf16.mxu0 0
    %159 = vmatpush1.bf16.msra.mxu0 0
    %160 = vmatprep.subr.bf16.mxu0 0
    %161 = vmatpush1.bf16.msra.mxu0 0
    %162 = vmatprep.subr.bf16.mxu0 0
    %163 = vmatpush1.bf16.msra.mxu0 0
    %164 = vmatprep.subr.bf16.mxu0 0
    %165 = vmatpush1.bf16.msra.mxu0 0
    %166 = vmatprep.subr.bf16.mxu0 0
    %167 = vmatpush1.bf16.msra.mxu0 0
    %168 = vmatprep.subr.bf16.mxu0 0
    %169 = vmatpush1.bf16.msra.mxu0 0
    %170 = vmatprep.subr.bf16.mxu0 0
    %171 = vmatpush1.bf16.msra.mxu0 0
    %172 = vmatprep.mubr.bf16.mxu0 0
    %173 = vmatmul.mubr.bf16.gmra.mrb[0].mxu0 %v135
    %v174 = vpop.f32.mrb[0].mxu0
    %v175 = vadd.f32 0.0, %v174
    %v176 = vpop.f32.mrb[0].mxu0
    %v177 = vpop.f32.mrb[0].mxu0
    %v178 = vpop.f32.mrb[0].mxu0
    %179 = vdwg.mxu0
    %v180 = vadd.f32 %v127, %v175
    %vm181 = vcmask 523264
    %182 = vst.msk [vmem:[#allocation2] sm:$0xff] %vm181, %v180
    %v183 = vsel %vm181, %v180, 0.0
    %184 = vadd.xlane.f32.xlu0 %v183
    %v185 = vpop.xlane.xlu0 %184
    %s186 = scalar_lea.vmem %s0, 8
    %v187 = vld [vmem:[%s186] sm:$0xf]
    %v188 = vld [vmem:[%s186 + $0x4] sm:$0x3]
    %s189 = scalar_lea.vmem %s1, 8
    %v190 = vld [vmem:[%s189] sm:$0xf]
    %v191 = vld [vmem:[%s189 + $0x4] sm:$0x3]
    %v194 = vunpack.c.l.b16 %v190
    %v195 = vunpack.c.l.b16 %v191
    %v196 = vpack.c.b16 %v195, %v194
    %v198 = vsel %vm37, %v196, 0
    %200 = vmatprep.subr.bf16.mxu0 0
    %201 = vmatpush1.bf16.msra.mxu0 %v198
    %202 = vmatprep.subr.bf16.mxu0 0
    %203 = vmatpush1.bf16.msra.mxu0 0
    %204 = vmatprep.subr.bf16.mxu0 0
    %205 = vmatpush1.bf16.msra.mxu0 0
    %206 = vmatprep.subr.bf16.mxu0 0
    %207 = vmatpush1.bf16.msra.mxu0 0
    %208 = vmatprep.subr.bf16.mxu0 0
    %209 = vmatpush1.bf16.msra.mxu0 0
    %210 = vmatprep.subr.bf16.mxu0 0
    %211 = vmatpush1.bf16.msra.mxu0 0
    %212 = vmatprep.subr.bf16.mxu0 0
    %213 = vmatpush1.bf16.msra.mxu0 0
    %214 = vmatprep.subr.bf16.mxu0 0
    %215 = vmatpush1.bf16.msra.mxu0 0
    %216 = vmatprep.subr.bf16.mxu0 0
    %217 = vmatpush1.bf16.msra.mxu0 0
    %218 = vmatprep.subr.bf16.mxu0 0
    %219 = vmatpush1.bf16.msra.mxu0 0
    %220 = vmatprep.subr.bf16.mxu0 0
    %221 = vmatpush1.bf16.msra.mxu0 0
    %222 = vmatprep.subr.bf16.mxu0 0
    %223 = vmatpush1.bf16.msra.mxu0 0
    %224 = vmatprep.subr.bf16.mxu0 0
    %225 = vmatpush1.bf16.msra.mxu0 0
    %226 = vmatprep.subr.bf16.mxu0 0
    %227 = vmatpush1.bf16.msra.mxu0 0
    %228 = vmatprep.subr.bf16.mxu0 0
    %229 = vmatpush1.bf16.msra.mxu0 0
    %230 = vmatprep.subr.bf16.mxu0 0
    %231 = vmatpush1.bf16.msra.mxu0 0
    %232 = vmatprep.mubr.bf16.mxu0 0
    %233 = vmatmul.mubr.bf16.gmra.mrb[0].mxu0 %v35
    %v234 = vpop.f32.mrb[0].mxu0
    %v235 = vadd.f32 0.0, %v234
    %v236 = vpop.f32.mrb[0].mxu0
    %v237 = vpop.f32.mrb[0].mxu0
    %v238 = vpop.f32.mrb[0].mxu0
    %239 = vdwg.mxu0
    %v242 = vunpack.c.l.b16 %v187
    %v243 = vunpack.c.l.b16 %v188
    %v244 = vpack.c.b16 %v243, %v242
    %v246 = vsel %vm37, %v244, 0
    %248 = vmatprep.subr.bf16.mxu0 0
    %249 = vmatpush1.bf16.msra.mxu0 %v246
    %250 = vmatprep.subr.bf16.mxu0 0
    %251 = vmatpush1.bf16.msra.mxu0 0
    %252 = vmatprep.subr.bf16.mxu0 0
    %253 = vmatpush1.bf16.msra.mxu0 0
    %254 = vmatprep.subr.bf16.mxu0 0
    %255 = vmatpush1.bf16.msra.mxu0 0
    %256 = vmatprep.subr.bf16.mxu0 0
    %257 = vmatpush1.bf16.msra.mxu0 0
    %258 = vmatprep.subr.bf16.mxu0 0
    %259 = vmatpush1.bf16.msra.mxu0 0
    %260 = vmatprep.subr.bf16.mxu0 0
    %261 = vmatpush1.bf16.msra.mxu0 0
    %262 = vmatprep.subr.bf16.mxu0 0
    %263 = vmatpush1.bf16.msra.mxu0 0
    %264 = vmatprep.subr.bf16.mxu0 0
    %265 = vmatpush1.bf16.msra.mxu0 0
    %266 = vmatprep.subr.bf16.mxu0 0
    %267 = vmatpush1.bf16.msra.mxu0 0
    %268 = vmatprep.subr.bf16.mxu0 0
    %269 = vmatpush1.bf16.msra.mxu0 0
    %270 = vmatprep.subr.bf16.mxu0 0
    %271 = vmatpush1.bf16.msra.mxu0 0
    %272 = vmatprep.subr.bf16.mxu0 0
    %273 = vmatpush1.bf16.msra.mxu0 0
    %274 = vmatprep.subr.bf16.mxu0 0
    %275 = vmatpush1.bf16.msra.mxu0 0
    %276 = vmatprep.subr.bf16.mxu0 0
    %277 = vmatpush1.bf16.msra.mxu0 0
    %278 = vmatprep.subr.bf16.mxu0 0
    %279 = vmatpush1.bf16.msra.mxu0 0
    %280 = vmatprep.mubr.bf16.mxu0 0
    %281 = vmatmul.mubr.bf16.gmra.mrb[0].mxu0 %v87
    %v282 = vpop.f32.mrb[0].mxu0
    %v283 = vadd.f32 %v235, %v282
    %v284 = vpop.f32.mrb[0].mxu0
    %v285 = vpop.f32.mrb[0].mxu0
    %v286 = vpop.f32.mrb[0].mxu0
    %287 = vdwg.mxu0
    %288 = vrot.lane.b32.xlu0 %v244, 120
    %v289 = vpop.permute.xlu0 %288
    %v291 = vsel %vm37, %v289, 0
    %293 = vmatprep.subr.bf16.mxu0 0
    %294 = vmatpush1.bf16.msra.mxu0 %v291
    %295 = vmatprep.subr.bf16.mxu0 0
    %296 = vmatpush1.bf16.msra.mxu0 0
    %297 = vmatprep.subr.bf16.mxu0 0
    %298 = vmatpush1.bf16.msra.mxu0 0
    %299 = vmatprep.subr.bf16.mxu0 0
    %300 = vmatpush1.bf16.msra.mxu0 0
    %301 = vmatprep.subr.bf16.mxu0 0
    %302 = vmatpush1.bf16.msra.mxu0 0
    %303 = vmatprep.subr.bf16.mxu0 0
    %304 = vmatpush1.bf16.msra.mxu0 0
    %305 = vmatprep.subr.bf16.mxu0 0
    %306 = vmatpush1.bf16.msra.mxu0 0
    %307 = vmatprep.subr.bf16.mxu0 0
    %308 = vmatpush1.bf16.msra.mxu0 0
    %309 = vmatprep.subr.bf16.mxu0 0
    %310 = vmatpush1.bf16.msra.mxu0 0
    %311 = vmatprep.subr.bf16.mxu0 0
    %312 = vmatpush1.bf16.msra.mxu0 0
    %313 = vmatprep.subr.bf16.mxu0 0
    %314 = vmatpush1.bf16.msra.mxu0 0
    %315 = vmatprep.subr.bf16.mxu0 0
    %316 = vmatpush1.bf16.msra.mxu0 0
    %317 = vmatprep.subr.bf16.mxu0 0
    %318 = vmatpush1.bf16.msra.mxu0 0
    %319 = vmatprep.subr.bf16.mxu0 0
    %320 = vmatpush1.bf16.msra.mxu0 0
    %321 = vmatprep.subr.bf16.mxu0 0
    %322 = vmatpush1.bf16.msra.mxu0 0
    %323 = vmatprep.subr.bf16.mxu0 0
    %324 = vmatpush1.bf16.msra.mxu0 0
    %325 = vmatprep.mubr.bf16.mxu0 0
    %326 = vmatmul.mubr.bf16.gmra.mrb[0].mxu0 %v135
    %v327 = vpop.f32.mrb[0].mxu0
    %v328 = vadd.f32 0.0, %v327
    %v329 = vpop.f32.mrb[0].mxu0
    %v330 = vpop.f32.mrb[0].mxu0
    %v331 = vpop.f32.mrb[0].mxu0
    %332 = vdwg.mxu0
    %v333 = vadd.f32 %v283, %v328
    %s334 = scalar_lea.vmem [#allocation2], 8
    %335 = vst.msk [vmem:[%s334] sm:$0xff] %vm181, %v333
    %v336 = vsel %vm181, %v333, 0.0
    %337 = vadd.xlane.f32.xlu0 %v336
    %v338 = vpop.xlane.xlu0 %337
    %v339 = vadd.f32 %v185, %v338
    %v340 = vmul.f32 %v339, 0.0078125
    %v341 = vld [vmem:[#allocation2] sm:$0xff]
    %v342 = vsub.f32 %v341, %v340
    %v343 = vmul.f32 %v342, %v342
    %v344 = vsel %vm181, %v343, 0.0
    %345 = vadd.xlane.f32.xlu0 %v344
    %v346 = vpop.xlane.xlu0 %345
    %v347 = vld [vmem:[%s334] sm:$0xff]
    %v348 = vsub.f32 %v347, %v340
    %v349 = vmul.f32 %v348, %v348
    %v350 = vsel %vm181, %v349, 0.0
    %351 = vadd.xlane.f32.xlu0 %v350
    %v352 = vpop.xlane.xlu0 %351
    %v353 = vadd.f32 %v346, %v352
    %vm354 = vcmask 7168
    %355 = vst.msk [vmem:[%s4] sm:$0xff] %vm354, %v339
    %356 = vst.msk [vmem:[%s5] sm:$0xff] %vm354, %v353
    // Predicated region
    $region14: #{tpu_custom_call.1} parent=1 // pred_check
      _
    $region15: #{tpu_custom_call.1} parent=1 // pred_check_branch
      %358 = sbr.rel (0) target = $region17
    $region16: #{tpu_custom_call.1} parent=1 // pred_region
      %s360 = ssub.s32 256, 256
      %361 = vsyncadd [#allocation3], %s360
      %s362 = sshll.u32 [#allocation2], 4
      %s363 = int_to_ptr.vmem [resolvable:$true] %s362
      %368 = dma.vmem_to_hbm [thread:$0]  %s363, 256, %s3, [#allocation3], 128, 128, 8
    $region17: #{tpu_custom_call.1} parent=1 // pred_fallthru
      _
    // Predicated region
    $region18: #{tpu_custom_call.1} parent=1 // pred_check
      _
    $region19: #{tpu_custom_call.1} parent=1 // pred_check_branch
      %370 = sbr.rel (0) target = $region21
    $region20: #{tpu_custom_call.1} parent=1 // pred_region
      _
    $region21: #{tpu_custom_call.1} parent=1 // pred_fallthru
      _
    // Predicated region
    $region22: #{tpu_custom_call.1} parent=1 // pred_check
      _
    $region23: #{tpu_custom_call.1} parent=1 // pred_check_branch
      %372 = sbr.rel (0) target = $region25
    $region24: #{tpu_custom_call.1} parent=1 // pred_region
      _
    $region25: #{tpu_custom_call.1} parent=1 // pred_fallthru
      _
    // Predicated region
    $region26: #{tpu_custom_call.1} parent=1 // pred_check
      _
    $region27: #{tpu_custom_call.1} parent=1 // pred_check_branch
      %374 = sbr.rel (0) target = $region29
    $region28: #{tpu_custom_call.1} parent=1 // pred_region
      %375 = dma.done [#allocation3], 256
    $region29: #{tpu_custom_call.1} parent=1 // pred_fallthru
      _
    // Predicated region
    $region30: #{tpu_custom_call.1} parent=1 // pred_check
      _
    $region31: #{tpu_custom_call.1} parent=1 // pred_check_branch
      %377 = sbr.rel (0) target = $region33
    $region32: #{tpu_custom_call.1} parent=1 // pred_region
      _
    $region33: #{tpu_custom_call.1} parent=1 // pred_fallthru
      _
    // Predicated region
    $region34: #{tpu_custom_call.1} parent=1 // pred_check
      _
    $region35: #{tpu_custom_call.1} parent=1 // pred_check_branch
      %379 = sbr.rel (0) target = $region37
    $region36: #{tpu_custom_call.1} parent=1 // pred_region
      _
    $region37: #{tpu_custom_call.1} parent=1 // pred_fallthru
      _
    %380 = vsyncpa [#allocation3], 1

</llo_original>
